<compile_context>
chip_gen: v7x
topology: tpu7x:2x2x1
jax: 0.10.0
libtpu: 0.0.40
codegen_flags: <defaults>
</compile_context>

<pallas_src>
import functools

import numpy as np
import jax
import jax.numpy as jnp
from jax.experimental import pallas as pl
from jax.experimental.pallas import tpu as pltpu

_A = -0.75  # aten bicubic convolution coefficient


def _cubic1(t):
    # |t| <= 1 branch
    return ((_A + 2.0) * t - (_A + 3.0)) * t * t + 1.0


def _cubic2(t):
    # 1 < |t| < 2 branch
    return ((_A * t - 5.0 * _A) * t + 8.0 * _A) * t - 4.0 * _A


@functools.lru_cache(maxsize=None)
def _bicubic_weight_matrix_np(in_size, out_size):
    """Dense [out_size, in_size] 1-D bicubic interpolation matrix,
    align_corners=False, matching aten.upsample_bicubic2d tap placement and
    edge clamping.  Memoized so the Python loop runs once per shape."""
    W = np.zeros((out_size, in_size), dtype=np.float64)
    scale = in_size / out_size
    for o in range(out_size):
        src = scale * (o + 0.5) - 0.5  # area_pixel_compute_source_index (cubic)
        i0 = int(np.floor(src))
        t = src - i0
        coeffs = (_cubic2(t + 1.0), _cubic1(t), _cubic1(1.0 - t), _cubic2(2.0 - t))
        for k in range(4):
            col = min(max(i0 - 1 + k, 0), in_size - 1)  # upsample_get_value_bounded
            W[o, col] += coeffs[k]
    return W


def bicubic_weight_matrix(in_size, out_size):
    return jnp.asarray(_bicubic_weight_matrix_np(in_size, out_size), dtype=jnp.float32)


@functools.lru_cache(maxsize=None)
def _fused_weight_np(h_in, w_in, h_out, w_out):
    """[h_in*w_in, h_out*w_out] fused 2-D bicubic matrix: kron(Wy, Wx)^T.
    W_big[h*w_in + w, o*w_out + p] = Wy[o, h] * Wx[p, w]."""
    wy = _bicubic_weight_matrix_np(h_in, h_out)   # [h_out, h_in]
    wx = _bicubic_weight_matrix_np(w_in, w_out)   # [w_out, w_in]
    return np.kron(wy, wx).T.astype(np.float32)   # [h_in*w_in, h_out*w_out]


def _round_up(x, m):
    return ((x + m - 1) // m) * m


@functools.lru_cache(maxsize=None)
def _num_tensorcores():
    """Best-effort TensorCore-per-chip count; 1 if it can't be determined."""
    try:
        info = pltpu.get_tpu_info()
        for attr in ("num_cores", "core_count", "num_tensorcores",
                     "tensorcores_per_chip", "num_cores_per_chip"):
            v = getattr(info, attr, None)
            if isinstance(v, int) and v > 0:
                return v
    except Exception:
        pass
    try:
        kind = jax.devices()[0].device_kind.lower()
        if "7" in kind:  # v7x packs 2 TensorCores per chip; v5e/v6e have 1
            return 2
    except Exception:
        pass
    return 1


def _sublane_tile(dtype):
    itemsize = jnp.dtype(dtype).itemsize
    return {4: 8, 2: 16, 1: 32}.get(itemsize, 8)


def _upsample_matmul_kernel(x_ref, w_ref, o_ref):
    # x_ref: [B, H_in*W_in]   w_ref: [H_in*W_in, H_out*W_out]   o_ref: [B, H_out*W_out]
    o_ref[...] = jnp.dot(
        x_ref[...], w_ref[...], preferred_element_type=jnp.float32
    ).astype(o_ref.dtype)


@functools.partial(jax.jit, static_argnames=("out_hw", "block_rows"))
def upsample_bicubic2d(x, out_hw=(12, 32), block_rows=1024):
    """aten.upsample_bicubic2d(x, out_hw, align_corners=False) for NCHW input."""
    N, C, H_in, W_in = x.shape
    H_out, W_out = out_hw
    K = H_in * W_in          # 256 for the 16x16 case (2 x 128, lane-dense)
    M = H_out * W_out        # 384 for 12x32 (3 x 128, lane-dense -> unmasked stores)

    # Fused dense weight, VMEM-resident across all grid steps (constant
    # index_map -> pipeliner fetches it once).  Weight dtype follows the input
    # dtype so bf16 activations also get bf16 weights (half the HBM traffic,
    # full bf16 MXU rate); accumulation is always f32.
    w = jnp.asarray(_fused_weight_np(H_in, W_in, H_out, W_out), dtype=x.dtype)

    P = N * C
    sublane = _sublane_tile(x.dtype)
    num_tc = _num_tensorcores()

    # Number of grid steps: bounded by the VMEM block cap (block_rows rows per
    # step); on multi-TC chips with enough work per core, round the step count
    # up to a multiple of the TC count so the "parallel" axis stays balanced.
    n_steps = pl.cdiv(P, block_rows)
    min_rows_per_core = 256
    if num_tc > 1 and P >= num_tc * min_rows_per_core:
        n_steps = _round_up(max(n_steps, num_tc), num_tc)

    B = _round_up(pl.cdiv(P, n_steps), sublane)
    if B >= P:
        B = P  # single full-extent block: always layout-legal, no masking
    grid = pl.cdiv(P, B)

    xf = x.reshape(P, K)  # no padding: ragged last block handled by Pallas

    out = pl.pallas_call(
        _upsample_matmul_kernel,
        out_shape=jax.ShapeDtypeStruct((P, M), x.dtype),
        grid_spec=pl.GridSpec(
            grid=(grid,),
            in_specs=[
                pl.BlockSpec((B, K), lambda i: (i, 0)),   # blocked N*C rows
                pl.BlockSpec((K, M), lambda i: (0, 0)),   # weight: resident
            ],
            out_specs=pl.BlockSpec((B, M), lambda i: (i, 0)),
        ),
        compiler_params=pltpu.CompilerParams(
            dimension_semantics=("parallel",),
        ),
    )(xf, w)

    return out.reshape(N, C, H_out, W_out)


if __name__ == "__main__":
    key = jax.random.PRNGKey(0)
    x = jax.random.normal(key, (2, 4, 16, 16), dtype=jnp.float32)  # NCHW input

    y = jax.block_until_ready(upsample_bicubic2d(x, (12, 32)))
    assert y.shape == (2, 4, 12, 32), y.shape

    # Pure-JAX separable reference (same aten weights) to check the fused kernel.
    wy = bicubic_weight_matrix(16, 12)
    wx = bicubic_weight_matrix(16, 32)
    y_ref = jnp.einsum("oh,nchw,pw->ncop", wy, x, wx)
    np.testing.assert_allclose(np.asarray(y), np.asarray(y_ref), rtol=1e-5, atol=1e-5)

    # Exercise the ragged-last-block path (P not a multiple of B, no host pad).
    x2 = jax.random.normal(jax.random.PRNGKey(1), (3, 5, 16, 16), dtype=jnp.float32)
    y2 = jax.block_until_ready(upsample_bicubic2d(x2, (12, 32), block_rows=8))
    y2_ref = jnp.einsum("oh,nchw,pw->ncop", wy, x2, wx)
    np.testing.assert_allclose(np.asarray(y2), np.asarray(y2_ref), rtol=1e-5, atol=1e-5)

    # Sanity: bicubic weights sum to 1 -> constant input stays constant.
    ones_out = jax.block_until_ready(
        upsample_bicubic2d(jnp.ones((1, 1, 16, 16), jnp.float32), (12, 32))
    )
    np.testing.assert_allclose(np.asarray(ones_out), 1.0, rtol=1e-5, atol=1e-5)

    # bf16 path: bf16 activations + bf16 weights, f32 accumulation.
    xb = jax.random.normal(jax.random.PRNGKey(2), (2, 4, 16, 16), dtype=jnp.bfloat16)
    yb = jax.block_until_ready(upsample_bicubic2d(xb, (12, 32)))
    yb_ref = jnp.einsum("oh,nchw,pw->ncop", wy, xb.astype(jnp.float32), wx)
    np.testing.assert_allclose(
        np.asarray(yb, dtype=np.float32), np.asarray(yb_ref), rtol=3e-2, atol=3e-2
    )

    print("KERNEL_OK")
</pallas_src>

<mosaic_0001>
module attributes {stable_mosaic.version = 11 : i64} {
  func.func @_upsample_matmul_kernel(%arg0: i32, %arg1: memref<8x256xf32, #tpu.memory_space<vmem>>, %arg2: memref<256x384xf32, #tpu.memory_space<vmem>>, %arg3: memref<8x384xf32, #tpu.memory_space<vmem>>) attributes {dimension_semantics = [#tpu.dimension_semantics<parallel>], iteration_bounds = array<i64: 1>, scalar_prefetch = 0 : i64, scratch_operands = 0 : i64, tpu.core_type = #tpu.core_type<tc>, window_params = [{transform_indices = @transform_0, window_bounds = array<i64: 8, 256>}, {pipeline_mode = #tpu.pipeline_mode<synchronous>, transform_indices = @transform_1, window_bounds = array<i64: 256, 384>}, {transform_indices = @transform_2, window_bounds = array<i64: 8, 384>}]} {
    %c0 = arith.constant 0 : index
    %c0_0 = arith.constant 0 : index
    %0 = vector.load %arg1[%c0, %c0_0] : memref<8x256xf32, #tpu.memory_space<vmem>>, vector<8x256xf32>
    %c0_1 = arith.constant 0 : index
    %c0_2 = arith.constant 0 : index
    %1 = vector.load %arg2[%c0_1, %c0_2] : memref<256x384xf32, #tpu.memory_space<vmem>>, vector<256x384xf32>
    %cst = arith.constant dense<0.000000e+00> : vector<8x384xf32>
    %2 = tpu.matmul %0, %1, %cst {dimension_numbers = #tpu.dot_dimension_numbers<[1], [0], [0], [1], [0, 0, 1, 1], [], []>} : vector<8x256xf32>, vector<256x384xf32>, vector<8x384xf32> -> vector<8x384xf32>
    %c0_3 = arith.constant 0 : index
    %c0_4 = arith.constant 0 : index
    %3 = vector.load %arg3[%c0_3, %c0_4] : memref<8x384xf32, #tpu.memory_space<vmem>>, vector<8x384xf32>
    tpu.vector_store %arg3[%c0_3, %c0_4], %2 {strides = array<i32>} : memref<8x384xf32, #tpu.memory_space<vmem>>, vector<8x384xf32>,
    return
  }
  func.func @transform_0(%arg0: i32) -> (i32, i32) {
    %c0_i32 = arith.constant 0 : i32
    %c0_i32_0 = arith.constant 0 : i32
    return %arg0, %c0_i32 : i32, i32
  }
  func.func @transform_1(%arg0: i32) -> (i32, i32) {
    %c0_i32 = arith.constant 0 : i32
    %c0_i32_0 = arith.constant 0 : i32
    %c0_i32_1 = arith.constant 0 : i32
    return %c0_i32, %c0_i32_0 : i32, i32
  }
  func.func @transform_2(%arg0: i32) -> (i32, i32) {
    %c0_i32 = arith.constant 0 : i32
    %c0_i32_0 = arith.constant 0 : i32
    return %arg0, %c0_i32 : i32, i32
  }
}

</mosaic_0001>

<llo_original>
// kernel: upsample_bicubic2d.1
$region0: #{upsample_bicubic2d.1}
  #allocation0 [shape = 'u32[]', space=smem, size = 0x4, offset = 0x4, fixed_abs, tag = 'smem constant byte address 0x4 - core index']
  #allocation1 [shape = 'u32[144,128]{1,0:T(1,128)}', space=vmem, size = 0x12000, scoped, tag = 'internal scratch']
  %s0 = inlined_call_operand.vmem [shape: f32[8,256], index: 0, kind: input, shape index: {}]
  %s1 = inlined_call_operand.hbm [shape: f32[256,384], index: 1, kind: input, shape index: {}]
  %s2 = inlined_call_operand.vmem [shape: f32[8,384], index: 2, kind: output, shape index: {}]
  %s3 = sld [smem:[#allocation0]]
  $region22: #{upsample_bicubic2d.1} parent=0
    _
  %s5 = ssub.s32 1, %s3
  %s6 = scalar_select 0, %s5, %s3
  $region1: #{upsample_bicubic2d.1} parent=0
    #allocation2 [shape = 'u8[393216]{0}', space=vmem, size = 0x60000, scoped, tag = 'input window, operand 1, single buffered']
    #allocation3 [shape = 's32[1]{0}', space=sflag, size = 0x4, scoped, tag = 'scoped memory for upsample_bicubic2d.1']
    %7 = vsyncpa [#allocation3], 0
    // Predicated region
    $region2: #{upsample_bicubic2d.1} parent=1 // pred_check
      _
    $region3: #{upsample_bicubic2d.1} parent=1 // pred_check_branch
      %9 = sbr.rel (0) target = $region5
    $region4: #{upsample_bicubic2d.1} parent=1 // pred_region
      _
    $region5: #{upsample_bicubic2d.1} parent=1 // pred_fallthru
      _
    // Predicated region
    $region6: #{upsample_bicubic2d.1} parent=1 // pred_check
      _
    $region7: #{upsample_bicubic2d.1} parent=1 // pred_check_branch
      %11 = sbr.rel (0) target = $region9
    $region8: #{upsample_bicubic2d.1} parent=1 // pred_region
      %s13 = ssub.s32 12288, 12288
      %14 = vsyncadd [#allocation3], %s13
      %s15 = sshll.u32 [#allocation2], 4
      %s16 = int_to_ptr.vmem [resolvable:$true] %s15
      %21 = dma.hbm_to_vmem [thread:$0]  %s1, 12288, %s16, [#allocation3], 384, 384, 24
    $region9: #{upsample_bicubic2d.1} parent=1 // pred_fallthru
      _
    // Predicated region
    $region10: #{upsample_bicubic2d.1} parent=1 // pred_check
      _
    $region11: #{upsample_bicubic2d.1} parent=1 // pred_check_branch
      %23 = sbr.rel (0) target = $region13
    $region12: #{upsample_bicubic2d.1} parent=1 // pred_region
      %24 = dma.done [#allocation3], 12288
    $region13: #{upsample_bicubic2d.1} parent=1 // pred_fallthru
      _
    %v25 = vld [vmem:[%s0] sm:$0xff]
    %v26 = vld [vmem:[%s0 + $0x8] sm:$0xff]
    %v27 = vld [vmem:[#allocation2] sm:$0xff]
    %v28 = vld [vmem:[#allocation2 + $0x8] sm:$0xff]
    %v29 = vld [vmem:[#allocation2 + $0x10] sm:$0xff]
    %v30 = vld [vmem:[#allocation2 + $0x18] sm:$0xff]
    %v31 = vld [vmem:[#allocation2 + $0x20] sm:$0xff]
    %v32 = vld [vmem:[#allocation2 + $0x28] sm:$0xff]
    %v33 = vld [vmem:[#allocation2 + $0x30] sm:$0xff]
    %v34 = vld [vmem:[#allocation2 + $0x38] sm:$0xff]
    %v35 = vld [vmem:[#allocation2 + $0x40] sm:$0xff]
    %v36 = vld [vmem:[#allocation2 + $0x48] sm:$0xff]
    %v37 = vld [vmem:[#allocation2 + $0x50] sm:$0xff]
    %v38 = vld [vmem:[#allocation2 + $0x58] sm:$0xff]
    %v39 = vld [vmem:[#allocation2 + $0x60] sm:$0xff]
    %v40 = vld [vmem:[#allocation2 + $0x68] sm:$0xff]
    %v41 = vld [vmem:[#allocation2 + $0x70] sm:$0xff]
    %v42 = vld [vmem:[#allocation2 + $0x78] sm:$0xff]
    %v43 = vld [vmem:[#allocation2 + $0x80] sm:$0xff]
    %v44 = vld [vmem:[#allocation2 + $0x88] sm:$0xff]
    %v45 = vld [vmem:[#allocation2 + $0x90] sm:$0xff]
    %v46 = vld [vmem:[#allocation2 + $0x98] sm:$0xff]
    %v47 = vld [vmem:[#allocation2 + $0xa0] sm:$0xff]
    %v48 = vld [vmem:[#allocation2 + $0xa8] sm:$0xff]
    %v49 = vld [vmem:[#allocation2 + $0xb0] sm:$0xff]
    %v50 = vld [vmem:[#allocation2 + $0xb8] sm:$0xff]
    %v51 = vld [vmem:[#allocation2 + $0xc0] sm:$0xff]
    %v52 = vld [vmem:[#allocation2 + $0xc8] sm:$0xff]
    %v53 = vld [vmem:[#allocation2 + $0xd0] sm:$0xff]
    %v54 = vld [vmem:[#allocation2 + $0xd8] sm:$0xff]
    %v55 = vld [vmem:[#allocation2 + $0xe0] sm:$0xff]
    %v56 = vld [vmem:[#allocation2 + $0xe8] sm:$0xff]
    %v57 = vld [vmem:[#allocation2 + $0xf0] sm:$0xff]
    %v58 = vld [vmem:[#allocation2 + $0xf8] sm:$0xff]
    %v59 = vld [vmem:[#allocation2 + $0x100] sm:$0xff]
    %v60 = vld [vmem:[#allocation2 + $0x108] sm:$0xff]
    %v61 = vld [vmem:[#allocation2 + $0x110] sm:$0xff]
    %v62 = vld [vmem:[#allocation2 + $0x118] sm:$0xff]
    %v63 = vld [vmem:[#allocation2 + $0x120] sm:$0xff]
    %v64 = vld [vmem:[#allocation2 + $0x128] sm:$0xff]
    %v65 = vld [vmem:[#allocation2 + $0x130] sm:$0xff]
    %v66 = vld [vmem:[#allocation2 + $0x138] sm:$0xff]
    %v67 = vld [vmem:[#allocation2 + $0x140] sm:$0xff]
    %v68 = vld [vmem:[#allocation2 + $0x148] sm:$0xff]
    %v69 = vld [vmem:[#allocation2 + $0x150] sm:$0xff]
    %v70 = vld [vmem:[#allocation2 + $0x158] sm:$0xff]
    %v71 = vld [vmem:[#allocation2 + $0x160] sm:$0xff]
    %v72 = vld [vmem:[#allocation2 + $0x168] sm:$0xff]
    %v73 = vld [vmem:[#allocation2 + $0x170] sm:$0xff]
    %v74 = vld [vmem:[#allocation2 + $0x178] sm:$0xff]
    %v75 = vld [vmem:[#allocation2 + $0x180] sm:$0xff]
    %v76 = vld [vmem:[#allocation2 + $0x188] sm:$0xff]
    %v77 = vld [vmem:[#allocation2 + $0x190] sm:$0xff]
    %v78 = vld [vmem:[#allocation2 + $0x198] sm:$0xff]
    %v79 = vld [vmem:[#allocation2 + $0x1a0] sm:$0xff]
    %v80 = vld [vmem:[#allocation2 + $0x1a8] sm:$0xff]
    %v81 = vld [vmem:[#allocation2 + $0x1b0] sm:$0xff]
    %v82 = vld [vmem:[#allocation2 + $0x1b8] sm:$0xff]
    %v83 = vld [vmem:[#allocation2 + $0x1c0] sm:$0xff]
    %v84 = vld [vmem:[#allocation2 + $0x1c8] sm:$0xff]
    %v85 = vld [vmem:[#allocation2 + $0x1d0] sm:$0xff]
    %v86 = vld [vmem:[#allocation2 + $0x1d8] sm:$0xff]
    %v87 = vld [vmem:[#allocation2 + $0x1e0] sm:$0xff]
    %v88 = vld [vmem:[#allocation2 + $0x1e8] sm:$0xff]
    %v89 = vld [vmem:[#allocation2 + $0x1f0] sm:$0xff]
    %v90 = vld [vmem:[#allocation2 + $0x1f8] sm:$0xff]
    %v91 = vld [vmem:[#allocation2 + $0x200] sm:$0xff]
    %v92 = vld [vmem:[#allocation2 + $0x208] sm:$0xff]
    %v93 = vld [vmem:[#allocation2 + $0x210] sm:$0xff]
    %v94 = vld [vmem:[#allocation2 + $0x218] sm:$0xff]
    %v95 = vld [vmem:[#allocation2 + $0x220] sm:$0xff]
    %v96 = vld [vmem:[#allocation2 + $0x228] sm:$0xff]
    %v97 = vld [vmem:[#allocation2 + $0x230] sm:$0xff]
    %v98 = vld [vmem:[#allocation2 + $0x238] sm:$0xff]
    %v99 = vld [vmem:[#allocation2 + $0x240] sm:$0xff]
    %v100 = vld [vmem:[#allocation2 + $0x248] sm:$0xff]
    %v101 = vld [vmem:[#allocation2 + $0x250] sm:$0xff]
    %v102 = vld [vmem:[#allocation2 + $0x258] sm:$0xff]
    %v103 = vld [vmem:[#allocation2 + $0x260] sm:$0xff]
    %v104 = vld [vmem:[#allocation2 + $0x268] sm:$0xff]
    %v105 = vld [vmem:[#allocation2 + $0x270] sm:$0xff]
    %v106 = vld [vmem:[#allocation2 + $0x278] sm:$0xff]
    %v107 = vld [vmem:[#allocation2 + $0x280] sm:$0xff]
    %v108 = vld [vmem:[#allocation2 + $0x288] sm:$0xff]
    %v109 = vld [vmem:[#allocation2 + $0x290] sm:$0xff]
    %v110 = vld [vmem:[#allocation2 + $0x298] sm:$0xff]
    %v111 = vld [vmem:[#allocation2 + $0x2a0] sm:$0xff]
    %v112 = vld [vmem:[#allocation2 + $0x2a8] sm:$0xff]
    %v113 = vld [vmem:[#allocation2 + $0x2b0] sm:$0xff]
    %v114 = vld [vmem:[#allocation2 + $0x2b8] sm:$0xff]
    %v115 = vld [vmem:[#allocation2 + $0x2c0] sm:$0xff]
    %v116 = vld [vmem:[#allocation2 + $0x2c8] sm:$0xff]
    %v117 = vld [vmem:[#allocation2 + $0x2d0] sm:$0xff]
    %v118 = vld [vmem:[#allocation2 + $0x2d8] sm:$0xff]
    %v119 = vld [vmem:[#allocation2 + $0x2e0] sm:$0xff]
    %v120 = vld [vmem:[#allocation2 + $0x2e8] sm:$0xff]
    %v121 = vld [vmem:[#allocation2 + $0x2f0] sm:$0xff]
    %v122 = vld [vmem:[#allocation2 + $0x2f8] sm:$0xff]
    %123 = vmatprep.subr.mxu0 %v28
    %124 = vmatpush1.msra.mxu0 %v27
    %125 = vmatprep.subr.mxu0 %v31
    %126 = vmatpush1.msra.mxu0 %v30
    %127 = vmatprep.subr.mxu0 %v34
    %128 = vmatpush1.msra.mxu0 %v33
    %129 = vmatprep.subr.mxu0 %v37
    %130 = vmatpush1.msra.mxu0 %v36
    %131 = vmatprep.subr.mxu0 %v40
    %132 = vmatpush1.msra.mxu0 %v39
    %133 = vmatprep.subr.mxu0 %v43
    %134 = vmatpush1.msra.mxu0 %v42
    %135 = vmatprep.subr.mxu0 %v46
    %136 = vmatpush1.msra.mxu0 %v45
    %137 = vmatprep.subr.mxu0 %v49
    %138 = vmatpush1.msra.mxu0 %v48
    %139 = vmatprep.subr.mxu0 %v52
    %140 = vmatpush1.msra.mxu0 %v51
    %141 = vmatprep.subr.mxu0 %v55
    %142 = vmatpush1.msra.mxu0 %v54
    %143 = vmatprep.subr.mxu0 %v58
    %144 = vmatpush1.msra.mxu0 %v57
    %145 = vmatprep.subr.mxu0 %v61
    %146 = vmatpush1.msra.mxu0 %v60
    %147 = vmatprep.subr.mxu0 %v64
    %148 = vmatpush1.msra.mxu0 %v63
    %149 = vmatprep.subr.mxu0 %v67
    %150 = vmatpush1.msra.mxu0 %v66
    %151 = vmatprep.subr.mxu0 %v70
    %152 = vmatpush1.msra.mxu0 %v69
    %153 = vmatprep.subr.mxu0 %v73
    %154 = vmatpush1.msra.mxu0 %v72
    %155 = vmatprep.subr.mxu0 %v76
    %156 = vmatpush1.msra.mxu0 %v75
    %157 = vmatprep.subr.mxu0 %v79
    %158 = vmatpush1.msra.mxu0 %v78
    %159 = vmatprep.subr.mxu0 %v82
    %160 = vmatpush1.msra.mxu0 %v81
    %161 = vmatprep.subr.mxu0 %v85
    %162 = vmatpush1.msra.mxu0 %v84
    %163 = vmatprep.subr.mxu0 %v88
    %164 = vmatpush1.msra.mxu0 %v87
    %165 = vmatprep.subr.mxu0 %v91
    %166 = vmatpush1.msra.mxu0 %v90
    %167 = vmatprep.subr.mxu0 %v94
    %168 = vmatpush1.msra.mxu0 %v93
    %169 = vmatprep.subr.mxu0 %v97
    %170 = vmatpush1.msra.mxu0 %v96
    %171 = vmatprep.subr.mxu0 %v100
    %172 = vmatpush1.msra.mxu0 %v99
    %173 = vmatprep.subr.mxu0 %v103
    %174 = vmatpush1.msra.mxu0 %v102
    %175 = vmatprep.subr.mxu0 %v106
    %176 = vmatpush1.msra.mxu0 %v105
    %177 = vmatprep.subr.mxu0 %v109
    %178 = vmatpush1.msra.mxu0 %v108
    %179 = vmatprep.subr.mxu0 %v112
    %180 = vmatpush1.msra.mxu0 %v111
    %181 = vmatprep.subr.mxu0 %v115
    %182 = vmatpush1.msra.mxu0 %v114
    %183 = vmatprep.subr.mxu0 %v118
    %184 = vmatpush1.msra.mxu0 %v117
    %185 = vmatprep.subr.mxu0 %v121
    %186 = vmatpush1.msra.mxu0 %v120
    %187 = vmatprep.mubr.f32.mxu0 %v26
    %188 = vmatmul.mubr.f32.gmra.mrb[0].mxu0 %v25
    %v189 = vpop.f32.mrb[0].mxu0
    %v190 = vadd.f32 0.0, %v189
    %v191 = vpop.f32.mrb[0].mxu0
    %v192 = vadd.f32 0.0, %v191
    %193 = vdwg.mxu0
    %194 = vmatprep.subr.mxu0 0.0
    %195 = vmatpush1.msra.mxu0 %v29
    %196 = vmatprep.subr.mxu0 0.0
    %197 = vmatpush1.msra.mxu0 %v32
    %198 = vmatprep.subr.mxu0 0.0
    %199 = vmatpush1.msra.mxu0 %v35
    %200 = vmatprep.subr.mxu0 0.0
    %201 = vmatpush1.msra.mxu0 %v38
    %202 = vmatprep.subr.mxu0 0.0
    %203 = vmatpush1.msra.mxu0 %v41
    %204 = vmatprep.subr.mxu0 0.0
    %205 = vmatpush1.msra.mxu0 %v44
    %206 = vmatprep.subr.mxu0 0.0
    %207 = vmatpush1.msra.mxu0 %v47
    %208 = vmatprep.subr.mxu0 0.0
    %209 = vmatpush1.msra.mxu0 %v50
    %210 = vmatprep.subr.mxu0 0.0
    %211 = vmatpush1.msra.mxu0 %v53
    %212 = vmatprep.subr.mxu0 0.0
    %213 = vmatpush1.msra.mxu0 %v56
    %214 = vmatprep.subr.mxu0 0.0
    %215 = vmatpush1.msra.mxu0 %v59
    %216 = vmatprep.subr.mxu0 0.0
    %217 = vmatpush1.msra.mxu0 %v62
    %218 = vmatprep.subr.mxu0 0.0
    %219 = vmatpush1.msra.mxu0 %v65
    %220 = vmatprep.subr.mxu0 0.0
    %221 = vmatpush1.msra.mxu0 %v68
    %222 = vmatprep.subr.mxu0 0.0
    %223 = vmatpush1.msra.mxu0 %v71
    %224 = vmatprep.subr.mxu0 0.0
    %225 = vmatpush1.msra.mxu0 %v74
    %226 = vmatprep.subr.mxu0 0.0
    %227 = vmatpush1.msra.mxu0 %v77
    %228 = vmatprep.subr.mxu0 0.0
    %229 = vmatpush1.msra.mxu0 %v80
    %230 = vmatprep.subr.mxu0 0.0
    %231 = vmatpush1.msra.mxu0 %v83
    %232 = vmatprep.subr.mxu0 0.0
    %233 = vmatpush1.msra.mxu0 %v86
    %234 = vmatprep.subr.mxu0 0.0
    %235 = vmatpush1.msra.mxu0 %v89
    %236 = vmatprep.subr.mxu0 0.0
    %237 = vmatpush1.msra.mxu0 %v92
    %238 = vmatprep.subr.mxu0 0.0
    %239 = vmatpush1.msra.mxu0 %v95
    %240 = vmatprep.subr.mxu0 0.0
    %241 = vmatpush1.msra.mxu0 %v98
    %242 = vmatprep.subr.mxu0 0.0
    %243 = vmatpush1.msra.mxu0 %v101
    %244 = vmatprep.subr.mxu0 0.0
    %245 = vmatpush1.msra.mxu0 %v104
    %246 = vmatprep.subr.mxu0 0.0
    %247 = vmatpush1.msra.mxu0 %v107
    %248 = vmatprep.subr.mxu0 0.0
    %249 = vmatpush1.msra.mxu0 %v110
    %250 = vmatprep.subr.mxu0 0.0
    %251 = vmatpush1.msra.mxu0 %v113
    %252 = vmatprep.subr.mxu0 0.0
    %253 = vmatpush1.msra.mxu0 %v116
    %254 = vmatprep.subr.mxu0 0.0
    %255 = vmatpush1.msra.mxu0 %v119
    %256 = vmatprep.subr.mxu0 0.0
    %257 = vmatpush1.msra.mxu0 %v122
    %258 = vmatprep.mubr.f32.mxu0 %v26
    %259 = vmatmul.mubr.f32.gmra.mrb[0].mxu0 %v25
    %v260 = vpop.f32.mrb[0].mxu0
    %v261 = vadd.f32 0.0, %v260
    %v262 = vpop.f32.mrb[0].mxu0
    %263 = vdwg.mxu0
    %264 = vst [vmem:[%s2] sm:$0xff] %v190
    %265 = vst [vmem:[%s2 + $0x8] sm:$0xff] %v192
    %266 = vst [vmem:[%s2 + $0x10] sm:$0xff] %v261
    // Predicated region
    $region14: #{upsample_bicubic2d.1} parent=1 // pred_check
      _
    $region15: #{upsample_bicubic2d.1} parent=1 // pred_check_branch
      %268 = sbr.rel (0) target = $region17
    $region16: #{upsample_bicubic2d.1} parent=1 // pred_region
      _
    $region17: #{upsample_bicubic2d.1} parent=1 // pred_fallthru
      _
    // Predicated region
    $region18: #{upsample_bicubic2d.1} parent=1 // pred_check
      _
    $region19: #{upsample_bicubic2d.1} parent=1 // pred_check_branch
      %270 = sbr.rel (0) target = $region21
    $region20: #{upsample_bicubic2d.1} parent=1 // pred_region
      _
    $region21: #{upsample_bicubic2d.1} parent=1 // pred_fallthru
      _
    %271 = vsyncpa [#allocation3], 1

</llo_original>
